<compile_context>
chip_gen: v5e
topology: v5e:2x2
jax: 0.10.0
libtpu: 0.0.40
codegen_flags: <defaults>
</compile_context>

<pallas_src>
import functools

import jax
import jax.numpy as jnp
from jax.experimental import pallas as pl
from jax.experimental.pallas import tpu as pltpu

EPS = 1e-3


def fused_mul_conv1x1_bn_kernel(x_ref, w_ref, s_ref, gb_ref, o_ref, *, n_valid):
    # x_ref:  [Cin, HW]   activations (unpadded; Mosaic masks partial lane tiles)
    # w_ref:  [Cout, Cin] conv weight
    # s_ref:  [1, Cin]    per-input-channel scale (x116)
    # gb_ref: [Cout, 2]   packed (gamma, beta)
    # o_ref:  [Cout, HW]
    # n_valid: true number of pixels (N*H*W) for the batch statistics

    # Fold the channel scale into the weight: (x*s) . W^T == x . (W*s)^T.
    w = w_ref[...] * s_ref[...]                                 # [Cout, Cin]

    # 1x1 conv == matmul on the MXU, f32 accumulation.
    y = jnp.dot(w, x_ref[...],
                preferred_element_type=jnp.float32)             # [Cout, HW]

    # BatchNorm (training mode) batch statistics per output channel (rows),
    # two-pass form to match the reference and avoid cancellation.
    inv_n = 1.0 / n_valid
    mean = jnp.sum(y, axis=1, keepdims=True) * inv_n            # [Cout, 1]
    d = y - mean
    var = jnp.sum(d * d, axis=1, keepdims=True) * inv_n         # [Cout, 1]

    gb = gb_ref[...]                                            # [Cout, 2]
    gamma = gb[:, 0:1]
    beta = gb[:, 1:2]

    a = jax.lax.rsqrt(var + EPS) * gamma                        # [Cout, 1]
    o_ref[...] = d * a + beta


@jax.jit
def mul_conv1x1_bn(x111, x116, weight, gamma, beta):
    """x111: [N, Cin, H, W], x116: [N, Cin, 1, 1], weight: [Cout, Cin, 1, 1]."""
    N, Cin, H, W = x111.shape
    Cout = weight.shape[0]
    assert N == 1, "transpose-free layout assumes N == 1 (as in the module)"
    P = N * H * W

    # Free reshapes (no transposes for N=1, 1x1 kernel), no padding.
    x2d = x111.reshape(Cin, P).astype(jnp.float32)               # [Cin, HW]
    w2d = weight.reshape(Cout, Cin).astype(jnp.float32)          # [Cout, Cin]
    s2d = x116.reshape(1, Cin).astype(jnp.float32)               # [1, Cin]
    gb = jnp.stack([gamma.astype(jnp.float32),
                    beta.astype(jnp.float32)], axis=1)           # [Cout, 2]

    vmem = pl.BlockSpec(memory_space=pltpu.MemorySpace.VMEM)
    cost = pl.CostEstimate(
        flops=2 * Cout * Cin * P + 6 * Cout * P,
        transcendentals=Cout,
        bytes_accessed=4 * (Cin * P + Cout * Cin + Cin + 2 * Cout + Cout * P),
    )

    out2d = pl.pallas_call(
        functools.partial(fused_mul_conv1x1_bn_kernel, n_valid=float(P)),
        out_shape=jax.ShapeDtypeStruct((Cout, P), jnp.float32),
        in_specs=[vmem, vmem, vmem, vmem],
        out_specs=vmem,
        cost_estimate=cost,
        # Whole problem (<1 MB) fits comfortably in VMEM on v5e/v6e/v7x.
        # TODO(synk): if N (hence P) grows, switch to a grid over P (last,
        # "arbitrary" axis) with resident [Cout,1] sum/sum^2 accumulators.
    )(x2d, w2d, s2d, gb)

    return out2d.reshape(N, Cout, H, W)


def _reference(x111, x116, weight, gamma, beta):
    """Pure-JAX reference of the module forward (training-mode BN)."""
    N, Cin, H, W = x111.shape
    Cout = weight.shape[0]
    xs = x111 * x116                                            # [N,Cin,H,W]
    x_flat = jnp.transpose(xs, (0, 2, 3, 1)).reshape(N * H * W, Cin)
    y = jnp.dot(x_flat, weight.reshape(Cout, Cin).T,
                precision=jax.lax.Precision.HIGHEST)            # [P, Cout]
    mean = jnp.mean(y, axis=0, keepdims=True)
    var = jnp.mean((y - mean) ** 2, axis=0, keepdims=True)      # biased
    out = (y - mean) * jax.lax.rsqrt(var + EPS) * gamma.reshape(1, Cout) + beta.reshape(1, Cout)
    return jnp.transpose(out.reshape(N, H, W, Cout), (0, 3, 1, 2))


if __name__ == "__main__":
    key = jax.random.PRNGKey(0)
    k1, k2, k3 = jax.random.split(key, 3)

    N, Cin, H, W, Cout = 1, 480, 14, 14, 112

    # deterministic synthetic inputs (shapes from the module's forward)
    x111 = jax.random.normal(k1, (N, Cin, H, W), dtype=jnp.float32)
    x116 = jax.random.normal(k2, (N, Cin, 1, 1), dtype=jnp.float32)

    # deterministic parameters
    # Conv2d(480, 112, 1x1, bias=False): weight [112, 480, 1, 1]
    weight = jax.random.normal(k3, (Cout, Cin, 1, 1), dtype=jnp.float32) / jnp.sqrt(Cin)
    # BatchNorm2d affine params (PyTorch default init: gamma=1, beta=0)
    gamma = jnp.ones((Cout,), dtype=jnp.float32)
    beta = jnp.zeros((Cout,), dtype=jnp.float32)

    out = mul_conv1x1_bn(x111, x116, weight, gamma, beta)
    jax.block_until_ready(out)
    assert out.shape == (N, Cout, H, W)

    ref = _reference(x111, x116, weight, gamma, beta)
    assert jnp.allclose(out, ref, atol=1e-2, rtol=1e-2), float(jnp.max(jnp.abs(out - ref)))

    print("KERNEL_OK")
</pallas_src>

<mosaic_0001>
module attributes {stable_mosaic.version = 11 : i64} {
  func.func @fused_mul_conv1x1_bn_kernel(%arg0: memref<480x196xf32, #tpu.memory_space<vmem>>, %arg1: memref<112x480xf32, #tpu.memory_space<vmem>>, %arg2: memref<1x480xf32, #tpu.memory_space<vmem>>, %arg3: memref<112x2xf32, #tpu.memory_space<vmem>>, %arg4: memref<112x196xf32, #tpu.memory_space<vmem>>) attributes {dimension_semantics = [], scalar_prefetch = 0 : i64, scratch_operands = 0 : i64, tpu.core_type = #tpu.core_type<tc>} {
    %c0 = arith.constant 0 : index
    %c0_0 = arith.constant 0 : index
    %0 = vector.load %arg1[%c0, %c0_0] : memref<112x480xf32, #tpu.memory_space<vmem>>, vector<112x480xf32>
    %c0_1 = arith.constant 0 : index
    %c0_2 = arith.constant 0 : index
    %1 = vector.load %arg2[%c0_1, %c0_2] : memref<1x480xf32, #tpu.memory_space<vmem>>, vector<1x480xf32>
    %2 = vector.broadcast %1 : vector<1x480xf32> to vector<112x480xf32>
    %3 = arith.mulf %0, %2 : vector<112x480xf32>
    %c0_3 = arith.constant 0 : index
    %c0_4 = arith.constant 0 : index
    %4 = vector.load %arg0[%c0_3, %c0_4] : memref<480x196xf32, #tpu.memory_space<vmem>>, vector<480x196xf32>
    %cst = arith.constant dense<0.000000e+00> : vector<112x196xf32>
    %5 = tpu.matmul %3, %4, %cst {dimension_numbers = #tpu.dot_dimension_numbers<[1], [0], [0], [1], [0, 0, 1, 1], [], []>} : vector<112x480xf32>, vector<480x196xf32>, vector<112x196xf32> -> vector<112x196xf32>
    %cst_5 = arith.constant dense<0.000000e+00> : vector<112xf32>
    %6 = vector.multi_reduction <add>, %5, %cst_5 [1] : vector<112x196xf32> to vector<112xf32>
    %7 = vector.shape_cast %6 : vector<112xf32> to vector<112x1xf32>
    %cst_6 = arith.constant 0.00510204071 : f32
    %8 = vector.broadcast %cst_6 : f32 to vector<112x1xf32>
    %9 = arith.mulf %7, %8 : vector<112x1xf32>
    %10 = vector.broadcast %9 : vector<112x1xf32> to vector<112x196xf32>
    %11 = arith.subf %5, %10 : vector<112x196xf32>
    %12 = arith.mulf %11, %11 : vector<112x196xf32>
    %cst_7 = arith.constant dense<0.000000e+00> : vector<112xf32>
    %13 = vector.multi_reduction <add>, %12, %cst_7 [1] : vector<112x196xf32> to vector<112xf32>
    %14 = vector.shape_cast %13 : vector<112xf32> to vector<112x1xf32>
    %cst_8 = arith.constant 0.00510204071 : f32
    %15 = vector.broadcast %cst_8 : f32 to vector<112x1xf32>
    %16 = arith.mulf %14, %15 : vector<112x1xf32>
    %c0_9 = arith.constant 0 : index
    %c0_10 = arith.constant 0 : index
    %17 = vector.load %arg3[%c0_9, %c0_10] : memref<112x2xf32, #tpu.memory_space<vmem>>, vector<112x2xf32>
    %18 = vector.extract_strided_slice %17 {offsets = [0, 0], sizes = [112, 1], strides = [1, 1]} : vector<112x2xf32> to vector<112x1xf32>
    %19 = vector.extract_strided_slice %17 {offsets = [0, 1], sizes = [112, 1], strides = [1, 1]} : vector<112x2xf32> to vector<112x1xf32>
    %cst_11 = arith.constant 1.000000e-03 : f32
    %20 = vector.broadcast %cst_11 : f32 to vector<112x1xf32>
    %21 = arith.addf %16, %20 : vector<112x1xf32>
    %22 = math.rsqrt %21 : vector<112x1xf32>
    %23 = arith.mulf %22, %18 : vector<112x1xf32>
    %24 = vector.broadcast %23 : vector<112x1xf32> to vector<112x196xf32>
    %25 = arith.mulf %11, %24 : vector<112x196xf32>
    %26 = vector.broadcast %19 : vector<112x1xf32> to vector<112x196xf32>
    %27 = arith.addf %25, %26 : vector<112x196xf32>
    %c0_12 = arith.constant 0 : index
    %c0_13 = arith.constant 0 : index
    %28 = vector.load %arg4[%c0_12, %c0_13] : memref<112x196xf32, #tpu.memory_space<vmem>>, vector<112x196xf32>
    tpu.vector_store %arg4[%c0_12, %c0_13], %27 {strides = array<i32>} : memref<112x196xf32, #tpu.memory_space<vmem>>, vector<112x196xf32>,
    return
  }
}

</mosaic_0001>

<llo_original>
// kernel: mul_conv1x1_bn.1
$region0: #{mul_conv1x1_bn.1}
  #allocation0 [shape = 'u32[]', space=smem, size = 0x4, offset = 0x4, fixed_abs, tag = 'smem constant byte address 0x4 - core index']
  #allocation1 [shape = 'u32[72,128]{1,0:T(1,128)}', space=vmem, size = 0x9000, scoped, tag = 'internal scratch']
  %s0 = inlined_call_operand.vmem [shape: f32[480,196], index: 0, kind: input, shape index: {}]
  %s1 = inlined_call_operand.vmem [shape: f32[112,480], index: 1, kind: input, shape index: {}]
  %s2 = inlined_call_operand.vmem [shape: f32[1,480], index: 2, kind: input, shape index: {}]
  %s3 = inlined_call_operand.vmem [shape: f32[112,2], index: 3, kind: input, shape index: {}]
  %s4 = inlined_call_operand.vmem [shape: f32[112,196], index: 4, kind: output, shape index: {}]
  %s5 = sld [smem:[#allocation0]]
  $region26: #{mul_conv1x1_bn.1} parent=0
    _
  %s7 = ssub.s32 1, %s5
  %s8 = scalar_select 0, %s7, %s5
  // Predicated region
  $region2: #{mul_conv1x1_bn.1} parent=0 // pred_check
    _
  $region3: #{mul_conv1x1_bn.1} parent=0 // pred_check_branch
    %10 = sbr.rel (0) target = $region5
  $region4: #{mul_conv1x1_bn.1} parent=0 // pred_region
    _
  $region5: #{mul_conv1x1_bn.1} parent=0 // pred_fallthru
    _
  // Predicated region
  $region6: #{mul_conv1x1_bn.1} parent=0 // pred_check
    _
  $region7: #{mul_conv1x1_bn.1} parent=0 // pred_check_branch
    %12 = sbr.rel (0) target = $region9
  $region8: #{mul_conv1x1_bn.1} parent=0 // pred_region
    _
  $region9: #{mul_conv1x1_bn.1} parent=0 // pred_fallthru
    _
  // Predicated region
  $region10: #{mul_conv1x1_bn.1} parent=0 // pred_check
    _
  $region11: #{mul_conv1x1_bn.1} parent=0 // pred_check_branch
    %14 = sbr.rel (0) target = $region13
  $region12: #{mul_conv1x1_bn.1} parent=0 // pred_region
    _
  $region13: #{mul_conv1x1_bn.1} parent=0 // pred_fallthru
    _
  // Predicated region
  $region14: #{mul_conv1x1_bn.1} parent=0 // pred_check
    _
  $region15: #{mul_conv1x1_bn.1} parent=0 // pred_check_branch
    %16 = sbr.rel (0) target = $region17
  $region16: #{mul_conv1x1_bn.1} parent=0 // pred_region
    _
  $region17: #{mul_conv1x1_bn.1} parent=0 // pred_fallthru
    _
  %v17 = vld [vmem:[%s1] sm:$0xff]
  %v18 = vld [vmem:[%s1 + $0x8] sm:$0xff]
  %v19 = vld [vmem:[%s1 + $0x10] sm:$0xff]
  %v20 = vld [vmem:[%s1 + $0x18] sm:$0xff]
  %v21 = vld [vmem:[%s1 + $0x20] sm:$0xff]
  %v22 = vld [vmem:[%s1 + $0x28] sm:$0xff]
  %v23 = vld [vmem:[%s1 + $0x30] sm:$0xff]
  %v24 = vld [vmem:[%s1 + $0x38] sm:$0xff]
  %v25 = vld [vmem:[%s1 + $0x40] sm:$0xff]
  %v26 = vld [vmem:[%s1 + $0x48] sm:$0xff]
  %v27 = vld [vmem:[%s1 + $0x50] sm:$0xff]
  %v28 = vld [vmem:[%s1 + $0x58] sm:$0xff]
  %v29 = vld [vmem:[%s1 + $0x60] sm:$0xff]
  %v30 = vld [vmem:[%s1 + $0x68] sm:$0xff]
  %v31 = vld [vmem:[%s1 + $0x70] sm:$0xff]
  %v32 = vld [vmem:[%s1 + $0x78] sm:$0xff]
  %v33 = vld [vmem:[%s1 + $0x80] sm:$0xff]
  %v34 = vld [vmem:[%s1 + $0x88] sm:$0xff]
  %v35 = vld [vmem:[%s1 + $0x90] sm:$0xff]
  %v36 = vld [vmem:[%s1 + $0x98] sm:$0xff]
  %v37 = vld [vmem:[%s1 + $0xa0] sm:$0xff]
  %v38 = vld [vmem:[%s1 + $0xa8] sm:$0xff]
  %v39 = vld [vmem:[%s1 + $0xb0] sm:$0xff]
  %v40 = vld [vmem:[%s1 + $0xb8] sm:$0xff]
  %v41 = vld [vmem:[%s1 + $0xc0] sm:$0xff]
  %v42 = vld [vmem:[%s1 + $0xc8] sm:$0xff]
  %v43 = vld [vmem:[%s1 + $0xd0] sm:$0xff]
  %v44 = vld [vmem:[%s1 + $0xd8] sm:$0xff]
  %v45 = vld [vmem:[%s1 + $0xe0] sm:$0xff]
  %v46 = vld [vmem:[%s1 + $0xe8] sm:$0xff]
  %v47 = vld [vmem:[%s1 + $0xf0] sm:$0xff]
  %v48 = vld [vmem:[%s1 + $0xf8] sm:$0xff]
  %v49 = vld [vmem:[%s1 + $0x100] sm:$0xff]
  %v50 = vld [vmem:[%s1 + $0x108] sm:$0xff]
  %v51 = vld [vmem:[%s1 + $0x110] sm:$0xff]
  %v52 = vld [vmem:[%s1 + $0x118] sm:$0xff]
  %v53 = vld [vmem:[%s1 + $0x120] sm:$0xff]
  %v54 = vld [vmem:[%s1 + $0x128] sm:$0xff]
  %v55 = vld [vmem:[%s1 + $0x130] sm:$0xff]
  %v56 = vld [vmem:[%s1 + $0x138] sm:$0xff]
  %v57 = vld [vmem:[%s1 + $0x140] sm:$0xff]
  %v58 = vld [vmem:[%s1 + $0x148] sm:$0xff]
  %v59 = vld [vmem:[%s1 + $0x150] sm:$0xff]
  %v60 = vld [vmem:[%s1 + $0x158] sm:$0xff]
  %v61 = vld [vmem:[%s1 + $0x160] sm:$0xff]
  %v62 = vld [vmem:[%s1 + $0x168] sm:$0xff]
  %v63 = vld [vmem:[%s1 + $0x170] sm:$0xff]
  %v64 = vld [vmem:[%s1 + $0x178] sm:$0xff]
  %v65 = vld [vmem:[%s1 + $0x180] sm:$0xff]
  %v66 = vld [vmem:[%s1 + $0x188] sm:$0xff]
  %v67 = vld [vmem:[%s1 + $0x190] sm:$0xff]
  %v68 = vld [vmem:[%s1 + $0x198] sm:$0xff]
  %v69 = vld [vmem:[%s1 + $0x1a0] sm:$0xff]
  %v70 = vld [vmem:[%s1 + $0x1a8] sm:$0xff]
  %v71 = vld [vmem:[%s1 + $0x1b0] sm:$0xff]
  %v72 = vld [vmem:[%s1 + $0x1b8] sm:$0xff]
  %v73 = vld [vmem:[%s2] sm:$0xf]
  %v75 = vperm.slane %v73, 0
  %v76 = vperm.slane %v73, 1
  %v77 = vperm.slane %v73, 2
  %v78 = vperm.slane %v73, 3
  %v83 = vmul.f32 %v17, %v75
  %v84 = vmul.f32 %v18, %v76
  %v85 = vmul.f32 %v19, %v77
  %v86 = vmul.f32 %v20, %v78
  %v87 = vmul.f32 %v21, %v75
  %v88 = vmul.f32 %v22, %v76
  %v89 = vmul.f32 %v23, %v77
  %v90 = vmul.f32 %v24, %v78
  %v91 = vmul.f32 %v25, %v75
  %v92 = vmul.f32 %v26, %v76
  %v93 = vmul.f32 %v27, %v77
  %v94 = vmul.f32 %v28, %v78
  %v95 = vmul.f32 %v29, %v75
  %v96 = vmul.f32 %v30, %v76
  %v97 = vmul.f32 %v31, %v77
  %v98 = vmul.f32 %v32, %v78
  %v99 = vmul.f32 %v33, %v75
  %v100 = vmul.f32 %v34, %v76
  %v101 = vmul.f32 %v35, %v77
  %v102 = vmul.f32 %v36, %v78
  %v103 = vmul.f32 %v37, %v75
  %v104 = vmul.f32 %v38, %v76
  %v105 = vmul.f32 %v39, %v77
  %v106 = vmul.f32 %v40, %v78
  %v107 = vmul.f32 %v41, %v75
  %v108 = vmul.f32 %v42, %v76
  %v109 = vmul.f32 %v43, %v77
  %v110 = vmul.f32 %v44, %v78
  %v111 = vmul.f32 %v45, %v75
  %v112 = vmul.f32 %v46, %v76
  %v113 = vmul.f32 %v47, %v77
  %v114 = vmul.f32 %v48, %v78
  %v115 = vmul.f32 %v49, %v75
  %v116 = vmul.f32 %v50, %v76
  %v117 = vmul.f32 %v51, %v77
  %v118 = vmul.f32 %v52, %v78
  %v119 = vmul.f32 %v53, %v75
  %v120 = vmul.f32 %v54, %v76
  %v121 = vmul.f32 %v55, %v77
  %v122 = vmul.f32 %v56, %v78
  %v123 = vmul.f32 %v57, %v75
  %v124 = vmul.f32 %v58, %v76
  %v125 = vmul.f32 %v59, %v77
  %v126 = vmul.f32 %v60, %v78
  %v127 = vmul.f32 %v61, %v75
  %v128 = vmul.f32 %v62, %v76
  %v129 = vmul.f32 %v63, %v77
  %v130 = vmul.f32 %v64, %v78
  %v131 = vmul.f32 %v65, %v75
  %v132 = vmul.f32 %v66, %v76
  %v133 = vmul.f32 %v67, %v77
  %v134 = vmul.f32 %v68, %v78
  %v135 = vmul.f32 %v69, %v75
  %v136 = vmul.f32 %v70, %v76
  %v137 = vmul.f32 %v71, %v77
  %v138 = vmul.f32 %v72, %v78
  %v139 = vld [vmem:[%s0] sm:$0xff]
  %v140 = vld [vmem:[%s0 + $0x8] sm:$0xff]
  %v141 = vld [vmem:[%s0 + $0x10] sm:$0xff]
  %v142 = vld [vmem:[%s0 + $0x18] sm:$0xff]
  %v143 = vld [vmem:[%s0 + $0x20] sm:$0xff]
  %v144 = vld [vmem:[%s0 + $0x28] sm:$0xff]
  %v145 = vld [vmem:[%s0 + $0x30] sm:$0xff]
  %v146 = vld [vmem:[%s0 + $0x38] sm:$0xff]
  %v147 = vld [vmem:[%s0 + $0x40] sm:$0xff]
  %v148 = vld [vmem:[%s0 + $0x48] sm:$0xff]
  %v149 = vld [vmem:[%s0 + $0x50] sm:$0xff]
  %v150 = vld [vmem:[%s0 + $0x58] sm:$0xff]
  %v151 = vld [vmem:[%s0 + $0x60] sm:$0xff]
  %v152 = vld [vmem:[%s0 + $0x68] sm:$0xff]
  %v153 = vld [vmem:[%s0 + $0x70] sm:$0xff]
  %v154 = vld [vmem:[%s0 + $0x78] sm:$0xff]
  %v155 = vld [vmem:[%s0 + $0x80] sm:$0xff]
  %v156 = vld [vmem:[%s0 + $0x88] sm:$0xff]
  %v157 = vld [vmem:[%s0 + $0x90] sm:$0xff]
  %v158 = vld [vmem:[%s0 + $0x98] sm:$0xff]
  %v159 = vld [vmem:[%s0 + $0xa0] sm:$0xff]
  %v160 = vld [vmem:[%s0 + $0xa8] sm:$0xff]
  %v161 = vld [vmem:[%s0 + $0xb0] sm:$0xff]
  %v162 = vld [vmem:[%s0 + $0xb8] sm:$0xff]
  %v163 = vld [vmem:[%s0 + $0xc0] sm:$0xff]
  %v164 = vld [vmem:[%s0 + $0xc8] sm:$0xff]
  %v165 = vld [vmem:[%s0 + $0xd0] sm:$0xff]
  %v166 = vld [vmem:[%s0 + $0xd8] sm:$0xff]
  %v167 = vld [vmem:[%s0 + $0xe0] sm:$0xff]
  %v168 = vld [vmem:[%s0 + $0xe8] sm:$0xff]
  %v169 = vld [vmem:[%s0 + $0xf0] sm:$0xff]
  %v170 = vld [vmem:[%s0 + $0xf8] sm:$0xff]
  %v171 = vld [vmem:[%s0 + $0x100] sm:$0xff]
  %v172 = vld [vmem:[%s0 + $0x108] sm:$0xff]
  %v173 = vld [vmem:[%s0 + $0x110] sm:$0xff]
  %v174 = vld [vmem:[%s0 + $0x118] sm:$0xff]
  %v175 = vld [vmem:[%s0 + $0x120] sm:$0xff]
  %v176 = vld [vmem:[%s0 + $0x128] sm:$0xff]
  %v177 = vld [vmem:[%s0 + $0x130] sm:$0xff]
  %v178 = vld [vmem:[%s0 + $0x138] sm:$0xff]
  %v179 = vld [vmem:[%s0 + $0x140] sm:$0xff]
  %v180 = vld [vmem:[%s0 + $0x148] sm:$0xff]
  %v181 = vld [vmem:[%s0 + $0x150] sm:$0xff]
  %v182 = vld [vmem:[%s0 + $0x158] sm:$0xff]
  %v183 = vld [vmem:[%s0 + $0x160] sm:$0xff]
  %v184 = vld [vmem:[%s0 + $0x168] sm:$0xff]
  %v185 = vld [vmem:[%s0 + $0x170] sm:$0xff]
  %v186 = vld [vmem:[%s0 + $0x178] sm:$0xff]
  %v187 = vld [vmem:[%s0 + $0x180] sm:$0xff]
  %v188 = vld [vmem:[%s0 + $0x188] sm:$0xff]
  %v189 = vld [vmem:[%s0 + $0x190] sm:$0xff]
  %v190 = vld [vmem:[%s0 + $0x198] sm:$0xff]
  %v191 = vld [vmem:[%s0 + $0x1a0] sm:$0xff]
  %v192 = vld [vmem:[%s0 + $0x1a8] sm:$0xff]
  %v193 = vld [vmem:[%s0 + $0x1b0] sm:$0xff]
  %v194 = vld [vmem:[%s0 + $0x1b8] sm:$0xff]
  %v195 = vld [vmem:[%s0 + $0x1c0] sm:$0xff]
  %v196 = vld [vmem:[%s0 + $0x1c8] sm:$0xff]
  %v197 = vld [vmem:[%s0 + $0x1d0] sm:$0xff]
  %v198 = vld [vmem:[%s0 + $0x1d8] sm:$0xff]
  %v199 = vld [vmem:[%s0 + $0x1e0] sm:$0xff]
  %v200 = vld [vmem:[%s0 + $0x1e8] sm:$0xff]
  %v201 = vld [vmem:[%s0 + $0x1f0] sm:$0xff]
  %v202 = vld [vmem:[%s0 + $0x1f8] sm:$0xff]
  %v203 = vld [vmem:[%s0 + $0x200] sm:$0xff]
  %v204 = vld [vmem:[%s0 + $0x208] sm:$0xff]
  %v205 = vld [vmem:[%s0 + $0x210] sm:$0xff]
  %v206 = vld [vmem:[%s0 + $0x218] sm:$0xff]
  %v207 = vld [vmem:[%s0 + $0x220] sm:$0xff]
  %v208 = vld [vmem:[%s0 + $0x228] sm:$0xff]
  %v209 = vld [vmem:[%s0 + $0x230] sm:$0xff]
  %v210 = vld [vmem:[%s0 + $0x238] sm:$0xff]
  %v211 = vld [vmem:[%s0 + $0x240] sm:$0xff]
  %v212 = vld [vmem:[%s0 + $0x248] sm:$0xff]
  %v213 = vld [vmem:[%s0 + $0x250] sm:$0xff]
  %v214 = vld [vmem:[%s0 + $0x258] sm:$0xff]
  %v215 = vld [vmem:[%s0 + $0x260] sm:$0xff]
  %v216 = vld [vmem:[%s0 + $0x268] sm:$0xff]
  %v217 = vld [vmem:[%s0 + $0x270] sm:$0xff]
  %v218 = vld [vmem:[%s0 + $0x278] sm:$0xff]
  %v219 = vld [vmem:[%s0 + $0x280] sm:$0xff]
  %v220 = vld [vmem:[%s0 + $0x288] sm:$0xff]
  %v221 = vld [vmem:[%s0 + $0x290] sm:$0xff]
  %v222 = vld [vmem:[%s0 + $0x298] sm:$0xff]
  %v223 = vld [vmem:[%s0 + $0x2a0] sm:$0xff]
  %v224 = vld [vmem:[%s0 + $0x2a8] sm:$0xff]
  %v225 = vld [vmem:[%s0 + $0x2b0] sm:$0xff]
  %v226 = vld [vmem:[%s0 + $0x2b8] sm:$0xff]
  %v227 = vld [vmem:[%s0 + $0x2c0] sm:$0xff]
  %v228 = vld [vmem:[%s0 + $0x2c8] sm:$0xff]
  %v229 = vld [vmem:[%s0 + $0x2d0] sm:$0xff]
  %v230 = vld [vmem:[%s0 + $0x2d8] sm:$0xff]
  %v231 = vld [vmem:[%s0 + $0x2e0] sm:$0xff]
  %v232 = vld [vmem:[%s0 + $0x2e8] sm:$0xff]
  %v233 = vld [vmem:[%s0 + $0x2f0] sm:$0xff]
  %v234 = vld [vmem:[%s0 + $0x2f8] sm:$0xff]
  %v235 = vld [vmem:[%s0 + $0x300] sm:$0xff]
  %v236 = vld [vmem:[%s0 + $0x308] sm:$0xff]
  %v237 = vld [vmem:[%s0 + $0x310] sm:$0xff]
  %v238 = vld [vmem:[%s0 + $0x318] sm:$0xff]
  %v239 = vld [vmem:[%s0 + $0x320] sm:$0xff]
  %v240 = vld [vmem:[%s0 + $0x328] sm:$0xff]
  %v241 = vld [vmem:[%s0 + $0x330] sm:$0xff]
  %v242 = vld [vmem:[%s0 + $0x338] sm:$0xff]
  %v243 = vld [vmem:[%s0 + $0x340] sm:$0xff]
  %v244 = vld [vmem:[%s0 + $0x348] sm:$0xff]
  %v245 = vld [vmem:[%s0 + $0x350] sm:$0xff]
  %v246 = vld [vmem:[%s0 + $0x358] sm:$0xff]
  %v247 = vld [vmem:[%s0 + $0x360] sm:$0xff]
  %v248 = vld [vmem:[%s0 + $0x368] sm:$0xff]
  %v249 = vld [vmem:[%s0 + $0x370] sm:$0xff]
  %v250 = vld [vmem:[%s0 + $0x378] sm:$0xff]
  %v251 = vld [vmem:[%s0 + $0x380] sm:$0xff]
  %v252 = vld [vmem:[%s0 + $0x388] sm:$0xff]
  %v253 = vld [vmem:[%s0 + $0x390] sm:$0xff]
  %v254 = vld [vmem:[%s0 + $0x398] sm:$0xff]
  %v255 = vld [vmem:[%s0 + $0x3a0] sm:$0xff]
  %v256 = vld [vmem:[%s0 + $0x3a8] sm:$0xff]
  %v257 = vld [vmem:[%s0 + $0x3b0] sm:$0xff]
  %v258 = vld [vmem:[%s0 + $0x3b8] sm:$0xff]
  %vm259 = vcmask 785408
  %v261 = vsel %vm259, %v86, 0
  %v264 = vsel %vm259, %v90, 0
  %v267 = vsel %vm259, %v94, 0
  %v270 = vsel %vm259, %v98, 0
  %v273 = vsel %vm259, %v102, 0
  %v276 = vsel %vm259, %v106, 0
  %v279 = vsel %vm259, %v110, 0
  %v282 = vsel %vm259, %v114, 0
  %v285 = vsel %vm259, %v118, 0
  %v288 = vsel %vm259, %v122, 0
  %v291 = vsel %vm259, %v126, 0
  %v294 = vsel %vm259, %v130, 0
  %v297 = vsel %vm259, %v134, 0
  %v300 = vsel %vm259, %v138, 0
  %302 = vmatpush.msra.mxu0 %v169
  %303 = vmatpush.msra.mxu0 %v167
  %304 = vmatpush.msra.mxu0 %v165
  %305 = vmatpush.msra.mxu0 %v163
  %306 = vmatpush.msra.mxu0 %v161
  %307 = vmatpush.msra.mxu0 %v159
  %308 = vmatpush.msra.mxu0 %v157
  %309 = vmatpush.msra.mxu0 %v155
  %310 = vmatpush.msra.mxu0 %v153
  %311 = vmatpush.msra.mxu0 %v151
  %312 = vmatpush.msra.mxu0 %v149
  %313 = vmatpush.msra.mxu0 %v147
  %314 = vmatpush.msra.mxu0 %v145
  %315 = vmatpush.msra.mxu0 %v143
  %316 = vmatpush.msra.mxu0 %v141
  %317 = vmatpush.msra.mxu0 %v139
  %318 = vmatmul.f32.gmra.mxu0 %v83
  %v319 = vpop.f32.mrf.mxu0
  %v320 = vadd.f32 0.0, %v319
  %321 = vmatmul.f32.gmra.mxu0 %v87
  %v322 = vpop.f32.mrf.mxu0
  %v323 = vadd.f32 0.0, %v322
  %324 = vmatmul.f32.gmra.mxu0 %v91
  %v325 = vpop.f32.mrf.mxu0
  %v326 = vadd.f32 0.0, %v325
  %327 = vmatmul.f32.gmra.mxu0 %v95
  %v328 = vpop.f32.mrf.mxu0
  %v329 = vadd.f32 0.0, %v328
  %330 = vmatmul.f32.gmra.mxu0 %v99
  %v331 = vpop.f32.mrf.mxu0
  %v332 = vadd.f32 0.0, %v331
  %333 = vmatmul.f32.gmra.mxu0 %v103
  %v334 = vpop.f32.mrf.mxu0
  %v335 = vadd.f32 0.0, %v334
  %336 = vmatmul.f32.gmra.mxu0 %v107
  %v337 = vpop.f32.mrf.mxu0
  %v338 = vadd.f32 0.0, %v337
  %339 = vmatmul.f32.gmra.mxu0 %v111
  %v340 = vpop.f32.mrf.mxu0
  %v341 = vadd.f32 0.0, %v340
  %342 = vmatmul.f32.gmra.mxu0 %v115
  %v343 = vpop.f32.mrf.mxu0
  %v344 = vadd.f32 0.0, %v343
  %345 = vmatmul.f32.gmra.mxu0 %v119
  %v346 = vpop.f32.mrf.mxu0
  %v347 = vadd.f32 0.0, %v346
  %348 = vmatmul.f32.gmra.mxu0 %v123
  %v349 = vpop.f32.mrf.mxu0
  %v350 = vadd.f32 0.0, %v349
  %351 = vmatmul.f32.gmra.mxu0 %v127
  %v352 = vpop.f32.mrf.mxu0
  %v353 = vadd.f32 0.0, %v352
  %354 = vmatmul.f32.gmra.mxu0 %v131
  %v355 = vpop.f32.mrf.mxu0
  %v356 = vadd.f32 0.0, %v355
  %357 = vmatmul.f32.gmra.mxu0 %v135
  %v358 = vpop.f32.mrf.mxu0
  %v359 = vadd.f32 0.0, %v358
  %360 = vdwg.mxu0
  %361 = vmatpush.msra.mxu0 %v201
  %362 = vmatpush.msra.mxu0 %v199
  %363 = vmatpush.msra.mxu0 %v197
  %364 = vmatpush.msra.mxu0 %v195
  %365 = vmatpush.msra.mxu0 %v193
  %366 = vmatpush.msra.mxu0 %v191
  %367 = vmatpush.msra.mxu0 %v189
  %368 = vmatpush.msra.mxu0 %v187
  %369 = vmatpush.msra.mxu0 %v185
  %370 = vmatpush.msra.mxu0 %v183
  %371 = vmatpush.msra.mxu0 %v181
  %372 = vmatpush.msra.mxu0 %v179
  %373 = vmatpush.msra.mxu0 %v177
  %374 = vmatpush.msra.mxu0 %v175
  %375 = vmatpush.msra.mxu0 %v173
  %376 = vmatpush.msra.mxu0 %v171
  %377 = vmatmul.f32.gmra.mxu0 %v84
  %v378 = vpop.f32.mrf.mxu0
  %v379 = vadd.f32 %v320, %v378
  %380 = vmatmul.f32.gmra.mxu0 %v88
  %v381 = vpop.f32.mrf.mxu0
  %v382 = vadd.f32 %v323, %v381
  %383 = vmatmul.f32.gmra.mxu0 %v92
  %v384 = vpop.f32.mrf.mxu0
  %v385 = vadd.f32 %v326, %v384
  %386 = vmatmul.f32.gmra.mxu0 %v96
  %v387 = vpop.f32.mrf.mxu0
  %v388 = vadd.f32 %v329, %v387
  %389 = vmatmul.f32.gmra.mxu0 %v100
  %v390 = vpop.f32.mrf.mxu0
  %v391 = vadd.f32 %v332, %v390
  %392 = vmatmul.f32.gmra.mxu0 %v104
  %v393 = vpop.f32.mrf.mxu0
  %v394 = vadd.f32 %v335, %v393
  %395 = vmatmul.f32.gmra.mxu0 %v108
  %v396 = vpop.f32.mrf.mxu0
  %v397 = vadd.f32 %v338, %v396
  %398 = vmatmul.f32.gmra.mxu0 %v112
  %v399 = vpop.f32.mrf.mxu0
  %v400 = vadd.f32 %v341, %v399
  %401 = vmatmul.f32.gmra.mxu0 %v116
  %v402 = vpop.f32.mrf.mxu0
  %v403 = vadd.f32 %v344, %v402
  %404 = vmatmul.f32.gmra.mxu0 %v120
  %v405 = vpop.f32.mrf.mxu0
  %v406 = vadd.f32 %v347, %v405
  %407 = vmatmul.f32.gmra.mxu0 %v124
  %v408 = vpop.f32.mrf.mxu0
  %v409 = vadd.f32 %v350, %v408
  %410 = vmatmul.f32.gmra.mxu0 %v128
  %v411 = vpop.f32.mrf.mxu0
  %v412 = vadd.f32 %v353, %v411
  %413 = vmatmul.f32.gmra.mxu0 %v132
  %v414 = vpop.f32.mrf.mxu0
  %v415 = vadd.f32 %v356, %v414
  %416 = vmatmul.f32.gmra.mxu0 %v136
  %v417 = vpop.f32.mrf.mxu0
  %v418 = vadd.f32 %v359, %v417
  %419 = vdwg.mxu0
  %420 = vmatpush.msra.mxu0 %v233
  %421 = vmatpush.msra.mxu0 %v231
  %422 = vmatpush.msra.mxu0 %v229
  %423 = vmatpush.msra.mxu0 %v227
  %424 = vmatpush.msra.mxu0 %v225
  %425 = vmatpush.msra.mxu0 %v223
  %426 = vmatpush.msra.mxu0 %v221
  %427 = vmatpush.msra.mxu0 %v219
  %428 = vmatpush.msra.mxu0 %v217
  %429 = vmatpush.msra.mxu0 %v215
  %430 = vmatpush.msra.mxu0 %v213
  %431 = vmatpush.msra.mxu0 %v211
  %432 = vmatpush.msra.mxu0 %v209
  %433 = vmatpush.msra.mxu0 %v207
  %434 = vmatpush.msra.mxu0 %v205
  %435 = vmatpush.msra.mxu0 %v203
  %436 = vmatmul.f32.gmra.mxu0 %v85
  %v437 = vpop.f32.mrf.mxu0
  %v438 = vadd.f32 %v379, %v437
  %439 = vmatmul.f32.gmra.mxu0 %v89
  %v440 = vpop.f32.mrf.mxu0
  %v441 = vadd.f32 %v382, %v440
  %442 = vmatmul.f32.gmra.mxu0 %v93
  %v443 = vpop.f32.mrf.mxu0
  %v444 = vadd.f32 %v385, %v443
  %445 = vmatmul.f32.gmra.mxu0 %v97
  %v446 = vpop.f32.mrf.mxu0
  %v447 = vadd.f32 %v388, %v446
  %448 = vmatmul.f32.gmra.mxu0 %v101
  %v449 = vpop.f32.mrf.mxu0
  %v450 = vadd.f32 %v391, %v449
  %451 = vmatmul.f32.gmra.mxu0 %v105
  %v452 = vpop.f32.mrf.mxu0
  %v453 = vadd.f32 %v394, %v452
  %454 = vmatmul.f32.gmra.mxu0 %v109
  %v455 = vpop.f32.mrf.mxu0
  %v456 = vadd.f32 %v397, %v455
  %457 = vmatmul.f32.gmra.mxu0 %v113
  %v458 = vpop.f32.mrf.mxu0
  %v459 = vadd.f32 %v400, %v458
  %460 = vmatmul.f32.gmra.mxu0 %v117
  %v461 = vpop.f32.mrf.mxu0
  %v462 = vadd.f32 %v403, %v461
  %463 = vmatmul.f32.gmra.mxu0 %v121
  %v464 = vpop.f32.mrf.mxu0
  %v465 = vadd.f32 %v406, %v464
  %466 = vmatmul.f32.gmra.mxu0 %v125
  %v467 = vpop.f32.mrf.mxu0
  %v468 = vadd.f32 %v409, %v467
  %469 = vmatmul.f32.gmra.mxu0 %v129
  %v470 = vpop.f32.mrf.mxu0
  %v471 = vadd.f32 %v412, %v470
  %472 = vmatmul.f32.gmra.mxu0 %v133
  %v473 = vpop.f32.mrf.mxu0
  %v474 = vadd.f32 %v415, %v473
  %475 = vmatmul.f32.gmra.mxu0 %v137
  %v476 = vpop.f32.mrf.mxu0
  %v477 = vadd.f32 %v418, %v476
  %478 = vdwg.mxu0
  %479 = vmatpush.msra.mxu0 0.0
  %480 = vmatpush.msra.mxu0 0.0
  %481 = vmatpush.msra.mxu0 0.0
  %482 = vmatpush.msra.mxu0 0.0
  %483 = vmatpush.msra.mxu0 %v257
  %484 = vmatpush.msra.mxu0 %v255
  %485 = vmatpush.msra.mxu0 %v253
  %486 = vmatpush.msra.mxu0 %v251
  %487 = vmatpush.msra.mxu0 %v249
  %488 = vmatpush.msra.mxu0 %v247
  %489 = vmatpush.msra.mxu0 %v245
  %490 = vmatpush.msra.mxu0 %v243
  %491 = vmatpush.msra.mxu0 %v241
  %492 = vmatpush.msra.mxu0 %v239
  %493 = vmatpush.msra.mxu0 %v237
  %494 = vmatpush.msra.mxu0 %v235
  %495 = vmatmul.f32.gmra.mxu0 %v261
  %v496 = vpop.f32.mrf.mxu0
  %v497 = vadd.f32 %v438, %v496
  %498 = vmatmul.f32.gmra.mxu0 %v264
  %v499 = vpop.f32.mrf.mxu0
  %v500 = vadd.f32 %v441, %v499
  %501 = vmatmul.f32.gmra.mxu0 %v267
  %v502 = vpop.f32.mrf.mxu0
  %v503 = vadd.f32 %v444, %v502
  %504 = vmatmul.f32.gmra.mxu0 %v270
  %v505 = vpop.f32.mrf.mxu0
  %v506 = vadd.f32 %v447, %v505
  %507 = vmatmul.f32.gmra.mxu0 %v273
  %v508 = vpop.f32.mrf.mxu0
  %v509 = vadd.f32 %v450, %v508
  %510 = vmatmul.f32.gmra.mxu0 %v276
  %v511 = vpop.f32.mrf.mxu0
  %v512 = vadd.f32 %v453, %v511
  %513 = vmatmul.f32.gmra.mxu0 %v279
  %v514 = vpop.f32.mrf.mxu0
  %v515 = vadd.f32 %v456, %v514
  %516 = vmatmul.f32.gmra.mxu0 %v282
  %v517 = vpop.f32.mrf.mxu0
  %v518 = vadd.f32 %v459, %v517
  %519 = vmatmul.f32.gmra.mxu0 %v285
  %v520 = vpop.f32.mrf.mxu0
  %v521 = vadd.f32 %v462, %v520
  %522 = vmatmul.f32.gmra.mxu0 %v288
  %v523 = vpop.f32.mrf.mxu0
  %v524 = vadd.f32 %v465, %v523
  %525 = vmatmul.f32.gmra.mxu0 %v291
  %v526 = vpop.f32.mrf.mxu0
  %v527 = vadd.f32 %v468, %v526
  %528 = vmatmul.f32.gmra.mxu0 %v294
  %v529 = vpop.f32.mrf.mxu0
  %v530 = vadd.f32 %v471, %v529
  %531 = vmatmul.f32.gmra.mxu0 %v297
  %v532 = vpop.f32.mrf.mxu0
  %v533 = vadd.f32 %v474, %v532
  %534 = vmatmul.f32.gmra.mxu0 %v300
  %v535 = vpop.f32.mrf.mxu0
  %v536 = vadd.f32 %v477, %v535
  %537 = vdwg.mxu0
  %538 = vmatpush.msra.mxu0 %v170
  %539 = vmatpush.msra.mxu0 %v168
  %540 = vmatpush.msra.mxu0 %v166
  %541 = vmatpush.msra.mxu0 %v164
  %542 = vmatpush.msra.mxu0 %v162
  %543 = vmatpush.msra.mxu0 %v160
  %544 = vmatpush.msra.mxu0 %v158
  %545 = vmatpush.msra.mxu0 %v156
  %546 = vmatpush.msra.mxu0 %v154
  %547 = vmatpush.msra.mxu0 %v152
  %548 = vmatpush.msra.mxu0 %v150
  %549 = vmatpush.msra.mxu0 %v148
  %550 = vmatpush.msra.mxu0 %v146
  %551 = vmatpush.msra.mxu0 %v144
  %552 = vmatpush.msra.mxu0 %v142
  %553 = vmatpush.msra.mxu0 %v140
  %554 = vmatmul.f32.gmra.mxu0 %v83
  %v555 = vpop.f32.mrf.mxu0
  %v556 = vadd.f32 0.0, %v555
  %557 = vmatmul.f32.gmra.mxu0 %v87
  %v558 = vpop.f32.mrf.mxu0
  %v559 = vadd.f32 0.0, %v558
  %560 = vmatmul.f32.gmra.mxu0 %v91
  %v561 = vpop.f32.mrf.mxu0
  %v562 = vadd.f32 0.0, %v561
  %563 = vmatmul.f32.gmra.mxu0 %v95
  %v564 = vpop.f32.mrf.mxu0
  %v565 = vadd.f32 0.0, %v564
  %566 = vmatmul.f32.gmra.mxu0 %v99
  %v567 = vpop.f32.mrf.mxu0
  %v568 = vadd.f32 0.0, %v567
  %569 = vmatmul.f32.gmra.mxu0 %v103
  %v570 = vpop.f32.mrf.mxu0
  %v571 = vadd.f32 0.0, %v570
  %572 = vmatmul.f32.gmra.mxu0 %v107
  %v573 = vpop.f32.mrf.mxu0
  %v574 = vadd.f32 0.0, %v573
  %575 = vmatmul.f32.gmra.mxu0 %v111
  %v576 = vpop.f32.mrf.mxu0
  %v577 = vadd.f32 0.0, %v576
  %578 = vmatmul.f32.gmra.mxu0 %v115
  %v579 = vpop.f32.mrf.mxu0
  %v580 = vadd.f32 0.0, %v579
  %581 = vmatmul.f32.gmra.mxu0 %v119
  %v582 = vpop.f32.mrf.mxu0
  %v583 = vadd.f32 0.0, %v582
  %584 = vmatmul.f32.gmra.mxu0 %v123
  %v585 = vpop.f32.mrf.mxu0
  %v586 = vadd.f32 0.0, %v585
  %587 = vmatmul.f32.gmra.mxu0 %v127
  %v588 = vpop.f32.mrf.mxu0
  %v589 = vadd.f32 0.0, %v588
  %590 = vmatmul.f32.gmra.mxu0 %v131
  %v591 = vpop.f32.mrf.mxu0
  %v592 = vadd.f32 0.0, %v591
  %593 = vmatmul.f32.gmra.mxu0 %v135
  %v594 = vpop.f32.mrf.mxu0
  %v595 = vadd.f32 0.0, %v594
  %596 = vdwg.mxu0
  %597 = vmatpush.msra.mxu0 %v202
  %598 = vmatpush.msra.mxu0 %v200
  %599 = vmatpush.msra.mxu0 %v198
  %600 = vmatpush.msra.mxu0 %v196
  %601 = vmatpush.msra.mxu0 %v194
  %602 = vmatpush.msra.mxu0 %v192
  %603 = vmatpush.msra.mxu0 %v190
  %604 = vmatpush.msra.mxu0 %v188
  %605 = vmatpush.msra.mxu0 %v186
  %606 = vmatpush.msra.mxu0 %v184
  %607 = vmatpush.msra.mxu0 %v182
  %608 = vmatpush.msra.mxu0 %v180
  %609 = vmatpush.msra.mxu0 %v178
  %610 = vmatpush.msra.mxu0 %v176
  %611 = vmatpush.msra.mxu0 %v174
  %612 = vmatpush.msra.mxu0 %v172
  %613 = vmatmul.f32.gmra.mxu0 %v84
  %v614 = vpop.f32.mrf.mxu0
  %v615 = vadd.f32 %v556, %v614
  %616 = vmatmul.f32.gmra.mxu0 %v88
  %v617 = vpop.f32.mrf.mxu0
  %v618 = vadd.f32 %v559, %v617
  %619 = vmatmul.f32.gmra.mxu0 %v92
  %v620 = vpop.f32.mrf.mxu0
  %v621 = vadd.f32 %v562, %v620
  %622 = vmatmul.f32.gmra.mxu0 %v96
  %v623 = vpop.f32.mrf.mxu0
  %v624 = vadd.f32 %v565, %v623
  %625 = vmatmul.f32.gmra.mxu0 %v100
  %v626 = vpop.f32.mrf.mxu0
  %v627 = vadd.f32 %v568, %v626
  %628 = vmatmul.f32.gmra.mxu0 %v104
  %v629 = vpop.f32.mrf.mxu0
  %v630 = vadd.f32 %v571, %v629
  %631 = vmatmul.f32.gmra.mxu0 %v108
  %v632 = vpop.f32.mrf.mxu0
  %v633 = vadd.f32 %v574, %v632
  %634 = vmatmul.f32.gmra.mxu0 %v112
  %v635 = vpop.f32.mrf.mxu0
  %v636 = vadd.f32 %v577, %v635
  %637 = vmatmul.f32.gmra.mxu0 %v116
  %v638 = vpop.f32.mrf.mxu0
  %v639 = vadd.f32 %v580, %v638
  %640 = vmatmul.f32.gmra.mxu0 %v120
  %v641 = vpop.f32.mrf.mxu0
  %v642 = vadd.f32 %v583, %v641
  %643 = vmatmul.f32.gmra.mxu0 %v124
  %v644 = vpop.f32.mrf.mxu0
  %v645 = vadd.f32 %v586, %v644
  %646 = vmatmul.f32.gmra.mxu0 %v128
  %v647 = vpop.f32.mrf.mxu0
  %v648 = vadd.f32 %v589, %v647
  %649 = vmatmul.f32.gmra.mxu0 %v132
  %v650 = vpop.f32.mrf.mxu0
  %v651 = vadd.f32 %v592, %v650
  %652 = vmatmul.f32.gmra.mxu0 %v136
  %v653 = vpop.f32.mrf.mxu0
  %v654 = vadd.f32 %v595, %v653
  %655 = vdwg.mxu0
  %656 = vmatpush.msra.mxu0 %v234
  %657 = vmatpush.msra.mxu0 %v232
  %658 = vmatpush.msra.mxu0 %v230
  %659 = vmatpush.msra.mxu0 %v228
  %660 = vmatpush.msra.mxu0 %v226
  %661 = vmatpush.msra.mxu0 %v224
  %662 = vmatpush.msra.mxu0 %v222
  %663 = vmatpush.msra.mxu0 %v220
  %664 = vmatpush.msra.mxu0 %v218
  %665 = vmatpush.msra.mxu0 %v216
  %666 = vmatpush.msra.mxu0 %v214
  %667 = vmatpush.msra.mxu0 %v212
  %668 = vmatpush.msra.mxu0 %v210
  %669 = vmatpush.msra.mxu0 %v208
  %670 = vmatpush.msra.mxu0 %v206
  %671 = vmatpush.msra.mxu0 %v204
  %672 = vmatmul.f32.gmra.mxu0 %v85
  %v673 = vpop.f32.mrf.mxu0
  %v674 = vadd.f32 %v615, %v673
  %675 = vmatmul.f32.gmra.mxu0 %v89
  %v676 = vpop.f32.mrf.mxu0
  %v677 = vadd.f32 %v618, %v676
  %678 = vmatmul.f32.gmra.mxu0 %v93
  %v679 = vpop.f32.mrf.mxu0
  %v680 = vadd.f32 %v621, %v679
  %681 = vmatmul.f32.gmra.mxu0 %v97
  %v682 = vpop.f32.mrf.mxu0
  %v683 = vadd.f32 %v624, %v682
  %684 = vmatmul.f32.gmra.mxu0 %v101
  %v685 = vpop.f32.mrf.mxu0
  %v686 = vadd.f32 %v627, %v685
  %687 = vmatmul.f32.gmra.mxu0 %v105
  %v688 = vpop.f32.mrf.mxu0
  %v689 = vadd.f32 %v630, %v688
  %690 = vmatmul.f32.gmra.mxu0 %v109
  %v691 = vpop.f32.mrf.mxu0
  %v692 = vadd.f32 %v633, %v691
  %693 = vmatmul.f32.gmra.mxu0 %v113
  %v694 = vpop.f32.mrf.mxu0
  %v695 = vadd.f32 %v636, %v694
  %696 = vmatmul.f32.gmra.mxu0 %v117
  %v697 = vpop.f32.mrf.mxu0
  %v698 = vadd.f32 %v639, %v697
  %699 = vmatmul.f32.gmra.mxu0 %v121
  %v700 = vpop.f32.mrf.mxu0
  %v701 = vadd.f32 %v642, %v700
  %702 = vmatmul.f32.gmra.mxu0 %v125
  %v703 = vpop.f32.mrf.mxu0
  %v704 = vadd.f32 %v645, %v703
  %705 = vmatmul.f32.gmra.mxu0 %v129
  %v706 = vpop.f32.mrf.mxu0
  %v707 = vadd.f32 %v648, %v706
  %708 = vmatmul.f32.gmra.mxu0 %v133
  %v709 = vpop.f32.mrf.mxu0
  %v710 = vadd.f32 %v651, %v709
  %711 = vmatmul.f32.gmra.mxu0 %v137
  %v712 = vpop.f32.mrf.mxu0
  %v713 = vadd.f32 %v654, %v712
  %714 = vdwg.mxu0
  %715 = vmatpush.msra.mxu0 0.0
  %716 = vmatpush.msra.mxu0 0.0
  %717 = vmatpush.msra.mxu0 0.0
  %718 = vmatpush.msra.mxu0 0.0
  %719 = vmatpush.msra.mxu0 %v258
  %720 = vmatpush.msra.mxu0 %v256
  %721 = vmatpush.msra.mxu0 %v254
  %722 = vmatpush.msra.mxu0 %v252
  %723 = vmatpush.msra.mxu0 %v250
  %724 = vmatpush.msra.mxu0 %v248
  %725 = vmatpush.msra.mxu0 %v246
  %726 = vmatpush.msra.mxu0 %v244
  %727 = vmatpush.msra.mxu0 %v242
  %728 = vmatpush.msra.mxu0 %v240
  %729 = vmatpush.msra.mxu0 %v238
  %730 = vmatpush.msra.mxu0 %v236
  %731 = vmatmul.f32.gmra.mxu0 %v261
  %v732 = vpop.f32.mrf.mxu0
  %v733 = vadd.f32 %v674, %v732
  %734 = vmatmul.f32.gmra.mxu0 %v264
  %v735 = vpop.f32.mrf.mxu0
  %v736 = vadd.f32 %v677, %v735
  %737 = vmatmul.f32.gmra.mxu0 %v267
  %v738 = vpop.f32.mrf.mxu0
  %v739 = vadd.f32 %v680, %v738
  %740 = vmatmul.f32.gmra.mxu0 %v270
  %v741 = vpop.f32.mrf.mxu0
  %v742 = vadd.f32 %v683, %v741
  %743 = vmatmul.f32.gmra.mxu0 %v273
  %v744 = vpop.f32.mrf.mxu0
  %v745 = vadd.f32 %v686, %v744
  %746 = vmatmul.f32.gmra.mxu0 %v276
  %v747 = vpop.f32.mrf.mxu0
  %v748 = vadd.f32 %v689, %v747
  %749 = vmatmul.f32.gmra.mxu0 %v279
  %v750 = vpop.f32.mrf.mxu0
  %v751 = vadd.f32 %v692, %v750
  %752 = vmatmul.f32.gmra.mxu0 %v282
  %v753 = vpop.f32.mrf.mxu0
  %v754 = vadd.f32 %v695, %v753
  %755 = vmatmul.f32.gmra.mxu0 %v285
  %v756 = vpop.f32.mrf.mxu0
  %v757 = vadd.f32 %v698, %v756
  %758 = vmatmul.f32.gmra.mxu0 %v288
  %v759 = vpop.f32.mrf.mxu0
  %v760 = vadd.f32 %v701, %v759
  %761 = vmatmul.f32.gmra.mxu0 %v291
  %v762 = vpop.f32.mrf.mxu0
  %v763 = vadd.f32 %v704, %v762
  %764 = vmatmul.f32.gmra.mxu0 %v294
  %v765 = vpop.f32.mrf.mxu0
  %v766 = vadd.f32 %v707, %v765
  %767 = vmatmul.f32.gmra.mxu0 %v297
  %v768 = vpop.f32.mrf.mxu0
  %v769 = vadd.f32 %v710, %v768
  %770 = vmatmul.f32.gmra.mxu0 %v300
  %v771 = vpop.f32.mrf.mxu0
  %v772 = vadd.f32 %v713, %v771
  %773 = vdwg.mxu0
  %vm774 = vcmask 556032
  %v775 = vsel %vm774, %v733, 0.0
  %v776 = vadd.f32 %v497, %v775
  %777 = vadd.xlane.f32.xlu0 %v776
  %v778 = vpop.xlane.xlu0 %777
  %v779 = vsel %vm774, %v736, 0.0
  %v780 = vadd.f32 %v500, %v779
  %781 = vadd.xlane.f32.xlu0 %v780
  %v782 = vpop.xlane.xlu0 %781
  %v783 = vsel %vm774, %v739, 0.0
  %v784 = vadd.f32 %v503, %v783
  %785 = vadd.xlane.f32.xlu0 %v784
  %v786 = vpop.xlane.xlu0 %785
  %v787 = vsel %vm774, %v742, 0.0
  %v788 = vadd.f32 %v506, %v787
  %789 = vadd.xlane.f32.xlu0 %v788
  %v790 = vpop.xlane.xlu0 %789
  %v791 = vsel %vm774, %v745, 0.0
  %v792 = vadd.f32 %v509, %v791
  %793 = vadd.xlane.f32.xlu0 %v792
  %v794 = vpop.xlane.xlu0 %793
  %v795 = vsel %vm774, %v748, 0.0
  %v796 = vadd.f32 %v512, %v795
  %797 = vadd.xlane.f32.xlu0 %v796
  %v798 = vpop.xlane.xlu0 %797
  %v799 = vsel %vm774, %v751, 0.0
  %v800 = vadd.f32 %v515, %v799
  %801 = vadd.xlane.f32.xlu0 %v800
  %v802 = vpop.xlane.xlu0 %801
  %v803 = vsel %vm774, %v754, 0.0
  %v804 = vadd.f32 %v518, %v803
  %805 = vadd.xlane.f32.xlu0 %v804
  %v806 = vpop.xlane.xlu0 %805
  %v807 = vsel %vm774, %v757, 0.0
  %v808 = vadd.f32 %v521, %v807
  %809 = vadd.xlane.f32.xlu0 %v808
  %v810 = vpop.xlane.xlu0 %809
  %v811 = vsel %vm774, %v760, 0.0
  %v812 = vadd.f32 %v524, %v811
  %813 = vadd.xlane.f32.xlu0 %v812
  %v814 = vpop.xlane.xlu0 %813
  %v815 = vsel %vm774, %v763, 0.0
  %v816 = vadd.f32 %v527, %v815
  %817 = vadd.xlane.f32.xlu0 %v816
  %v818 = vpop.xlane.xlu0 %817
  %v819 = vsel %vm774, %v766, 0.0
  %v820 = vadd.f32 %v530, %v819
  %821 = vadd.xlane.f32.xlu0 %v820
  %v822 = vpop.xlane.xlu0 %821
  %v823 = vsel %vm774, %v769, 0.0
  %v824 = vadd.f32 %v533, %v823
  %825 = vadd.xlane.f32.xlu0 %v824
  %v826 = vpop.xlane.xlu0 %825
  %v827 = vsel %vm774, %v772, 0.0
  %v828 = vadd.f32 %v536, %v827
  %829 = vadd.xlane.f32.xlu0 %v828
  %v830 = vpop.xlane.xlu0 %829
  %v831 = vmul.f32 %v778, 0.0051020407
  %v832 = vmul.f32 %v782, 0.0051020407
  %v833 = vmul.f32 %v786, 0.0051020407
  %v834 = vmul.f32 %v790, 0.0051020407
  %v835 = vmul.f32 %v794, 0.0051020407
  %v836 = vmul.f32 %v798, 0.0051020407
  %v837 = vmul.f32 %v802, 0.0051020407
  %v838 = vmul.f32 %v806, 0.0051020407
  %v839 = vmul.f32 %v810, 0.0051020407
  %v840 = vmul.f32 %v814, 0.0051020407
  %v841 = vmul.f32 %v818, 0.0051020407
  %v842 = vmul.f32 %v822, 0.0051020407
  %v843 = vmul.f32 %v826, 0.0051020407
  %v844 = vmul.f32 %v830, 0.0051020407
  %v845 = vsub.f32 %v497, %v831
  %v846 = vsub.f32 %v733, %v831
  %v847 = vsub.f32 %v500, %v832
  %v848 = vsub.f32 %v736, %v832
  %v849 = vsub.f32 %v503, %v833
  %v850 = vsub.f32 %v739, %v833
  %v851 = vsub.f32 %v506, %v834
  %v852 = vsub.f32 %v742, %v834
  %v853 = vsub.f32 %v509, %v835
  %v854 = vsub.f32 %v745, %v835
  %v855 = vsub.f32 %v512, %v836
  %v856 = vsub.f32 %v748, %v836
  %v857 = vsub.f32 %v515, %v837
  %v858 = vsub.f32 %v751, %v837
  %v859 = vsub.f32 %v518, %v838
  %v860 = vsub.f32 %v754, %v838
  %v861 = vsub.f32 %v521, %v839
  %v862 = vsub.f32 %v757, %v839
  %v863 = vsub.f32 %v524, %v840
  %v864 = vsub.f32 %v760, %v840
  %v865 = vsub.f32 %v527, %v841
  %v866 = vsub.f32 %v763, %v841
  %v867 = vsub.f32 %v530, %v842
  %v868 = vsub.f32 %v766, %v842
  %v869 = vsub.f32 %v533, %v843
  %v870 = vsub.f32 %v769, %v843
  %v871 = vsub.f32 %v536, %v844
  %v872 = vsub.f32 %v772, %v844
  %v873 = vmul.f32 %v845, %v845
  %v874 = vmul.f32 %v846, %v846
  %v875 = vmul.f32 %v847, %v847
  %v876 = vmul.f32 %v848, %v848
  %v877 = vmul.f32 %v849, %v849
  %v878 = vmul.f32 %v850, %v850
  %v879 = vmul.f32 %v851, %v851
  %v880 = vmul.f32 %v852, %v852
  %v881 = vmul.f32 %v853, %v853
  %v882 = vmul.f32 %v854, %v854
  %v883 = vmul.f32 %v855, %v855
  %v884 = vmul.f32 %v856, %v856
  %v885 = vmul.f32 %v857, %v857
  %v886 = vmul.f32 %v858, %v858
  %v887 = vmul.f32 %v859, %v859
  %v888 = vmul.f32 %v860, %v860
  %v889 = vmul.f32 %v861, %v861
  %v890 = vmul.f32 %v862, %v862
  %v891 = vmul.f32 %v863, %v863
  %v892 = vmul.f32 %v864, %v864
  %v893 = vmul.f32 %v865, %v865
  %v894 = vmul.f32 %v866, %v866
  %v895 = vmul.f32 %v867, %v867
  %v896 = vmul.f32 %v868, %v868
  %v897 = vmul.f32 %v869, %v869
  %v898 = vmul.f32 %v870, %v870
  %v899 = vmul.f32 %v871, %v871
  %v900 = vmul.f32 %v872, %v872
  %v901 = vsel %vm774, %v874, 0.0
  %v902 = vadd.f32 %v873, %v901
  %903 = vadd.xlane.f32.xlu0 %v902
  %v904 = vpop.xlane.xlu0 %903
  %v905 = vsel %vm774, %v876, 0.0
  %v906 = vadd.f32 %v875, %v905
  %907 = vadd.xlane.f32.xlu0 %v906
  %v908 = vpop.xlane.xlu0 %907
  %v909 = vsel %vm774, %v878, 0.0
  %v910 = vadd.f32 %v877, %v909
  %911 = vadd.xlane.f32.xlu0 %v910
  %v912 = vpop.xlane.xlu0 %911
  %v913 = vsel %vm774, %v880, 0.0
  %v914 = vadd.f32 %v879, %v913
  %915 = vadd.xlane.f32.xlu0 %v914
  %v916 = vpop.xlane.xlu0 %915
  %v917 = vsel %vm774, %v882, 0.0
  %v918 = vadd.f32 %v881, %v917
  %919 = vadd.xlane.f32.xlu0 %v918
  %v920 = vpop.xlane.xlu0 %919
  %v921 = vsel %vm774, %v884, 0.0
  %v922 = vadd.f32 %v883, %v921
  %923 = vadd.xlane.f32.xlu0 %v922
  %v924 = vpop.xlane.xlu0 %923
  %v925 = vsel %vm774, %v886, 0.0
  %v926 = vadd.f32 %v885, %v925
  %927 = vadd.xlane.f32.xlu0 %v926
  %v928 = vpop.xlane.xlu0 %927
  %v929 = vsel %vm774, %v888, 0.0
  %v930 = vadd.f32 %v887, %v929
  %931 = vadd.xlane.f32.xlu0 %v930
  %v932 = vpop.xlane.xlu0 %931
  %v933 = vsel %vm774, %v890, 0.0
  %v934 = vadd.f32 %v889, %v933
  %935 = vadd.xlane.f32.xlu0 %v934
  %v936 = vpop.xlane.xlu0 %935
  %v937 = vsel %vm774, %v892, 0.0
  %v938 = vadd.f32 %v891, %v937
  %939 = vadd.xlane.f32.xlu0 %v938
  %v940 = vpop.xlane.xlu0 %939
  %v941 = vsel %vm774, %v894, 0.0
  %v942 = vadd.f32 %v893, %v941
  %943 = vadd.xlane.f32.xlu0 %v942
  %v944 = vpop.xlane.xlu0 %943
  %v945 = vsel %vm774, %v896, 0.0
  %v946 = vadd.f32 %v895, %v945
  %947 = vadd.xlane.f32.xlu0 %v946
  %v948 = vpop.xlane.xlu0 %947
  %v949 = vsel %vm774, %v898, 0.0
  %v950 = vadd.f32 %v897, %v949
  %951 = vadd.xlane.f32.xlu0 %v950
  %v952 = vpop.xlane.xlu0 %951
  %v953 = vsel %vm774, %v900, 0.0
  %v954 = vadd.f32 %v899, %v953
  %955 = vadd.xlane.f32.xlu0 %v954
  %v956 = vpop.xlane.xlu0 %955
  %v957 = vmul.f32 %v904, 0.0051020407
  %v958 = vmul.f32 %v908, 0.0051020407
  %v959 = vmul.f32 %v912, 0.0051020407
  %v960 = vmul.f32 %v916, 0.0051020407
  %v961 = vmul.f32 %v920, 0.0051020407
  %v962 = vmul.f32 %v924, 0.0051020407
  %v963 = vmul.f32 %v928, 0.0051020407
  %v964 = vmul.f32 %v932, 0.0051020407
  %v965 = vmul.f32 %v936, 0.0051020407
  %v966 = vmul.f32 %v940, 0.0051020407
  %v967 = vmul.f32 %v944, 0.0051020407
  %v968 = vmul.f32 %v948, 0.0051020407
  %v969 = vmul.f32 %v952, 0.0051020407
  %v970 = vmul.f32 %v956, 0.0051020407
  %v971 = vld [vmem:[%s3] sm:$0xff]
  %v972 = vld [vmem:[%s3 + $0x8] sm:$0xff]
  %v973 = vld [vmem:[%s3 + $0x10] sm:$0xff]
  %v974 = vld [vmem:[%s3 + $0x18] sm:$0xff]
  %v975 = vld [vmem:[%s3 + $0x20] sm:$0xff]
  %v976 = vld [vmem:[%s3 + $0x28] sm:$0xff]
  %v977 = vld [vmem:[%s3 + $0x30] sm:$0xff]
  %v978 = vld [vmem:[%s3 + $0x38] sm:$0xff]
  %v979 = vld [vmem:[%s3 + $0x40] sm:$0xff]
  %v980 = vld [vmem:[%s3 + $0x48] sm:$0xff]
  %v981 = vld [vmem:[%s3 + $0x50] sm:$0xff]
  %v982 = vld [vmem:[%s3 + $0x58] sm:$0xff]
  %v983 = vld [vmem:[%s3 + $0x60] sm:$0xff]
  %v984 = vld [vmem:[%s3 + $0x68] sm:$0xff]
  %v985 = vadd.f32 %v957, 0.001
  %v986 = vadd.f32 %v958, 0.001
  %v987 = vadd.f32 %v959, 0.001
  %v988 = vadd.f32 %v960, 0.001
  %v989 = vadd.f32 %v961, 0.001
  %v990 = vadd.f32 %v962, 0.001
  %v991 = vadd.f32 %v963, 0.001
  %v992 = vadd.f32 %v964, 0.001
  %v993 = vadd.f32 %v965, 0.001
  %v994 = vadd.f32 %v966, 0.001
  %v995 = vadd.f32 %v967, 0.001
  %v996 = vadd.f32 %v968, 0.001
  %v997 = vadd.f32 %v969, 0.001
  %v998 = vadd.f32 %v970, 0.001
  %v999 = vrsqrt.pop %v985
  %v1000 = vmul.f32 %v999, %v985
  %v1001 = vmul.f32 %v1000, %v999
  %v1002 = vmul.f32 0.5, %v1001
  %v1003 = vsub.f32 1.5, %v1002
  %v1004 = vmul.f32 %v999, %v1003
  %vm1005 = vweird.f32 %v985
  %vm1006 = vweird.f32 %v999
  %vm1007 = vmor %vm1005, %vm1006
  %v1008 = vsel %vm1007, %v999, %v1004
  %v1009 = vrsqrt.pop %v986
  %v1010 = vmul.f32 %v1009, %v986
  %v1011 = vmul.f32 %v1010, %v1009
  %v1012 = vmul.f32 0.5, %v1011
  %v1013 = vsub.f32 1.5, %v1012
  %v1014 = vmul.f32 %v1009, %v1013
  %vm1015 = vweird.f32 %v986
  %vm1016 = vweird.f32 %v1009
  %vm1017 = vmor %vm1015, %vm1016
  %v1018 = vsel %vm1017, %v1009, %v1014
  %v1019 = vrsqrt.pop %v987
  %v1020 = vmul.f32 %v1019, %v987
  %v1021 = vmul.f32 %v1020, %v1019
  %v1022 = vmul.f32 0.5, %v1021
  %v1023 = vsub.f32 1.5, %v1022
  %v1024 = vmul.f32 %v1019, %v1023
  %vm1025 = vweird.f32 %v987
  %vm1026 = vweird.f32 %v1019
  %vm1027 = vmor %vm1025, %vm1026
  %v1028 = vsel %vm1027, %v1019, %v1024
  %v1029 = vrsqrt.pop %v988
  %v1030 = vmul.f32 %v1029, %v988
  %v1031 = vmul.f32 %v1030, %v1029
  %v1032 = vmul.f32 0.5, %v1031
  %v1033 = vsub.f32 1.5, %v1032
  %v1034 = vmul.f32 %v1029, %v1033
  %vm1035 = vweird.f32 %v988
  %vm1036 = vweird.f32 %v1029
  %vm1037 = vmor %vm1035, %vm1036
  %v1038 = vsel %vm1037, %v1029, %v1034
  %v1039 = vrsqrt.pop %v989
  %v1040 = vmul.f32 %v1039, %v989
  %v1041 = vmul.f32 %v1040, %v1039
  %v1042 = vmul.f32 0.5, %v1041
  %v1043 = vsub.f32 1.5, %v1042
  %v1044 = vmul.f32 %v1039, %v1043
  %vm1045 = vweird.f32 %v989
  %vm1046 = vweird.f32 %v1039
  %vm1047 = vmor %vm1045, %vm1046
  %v1048 = vsel %vm1047, %v1039, %v1044
  %v1049 = vrsqrt.pop %v990
  %v1050 = vmul.f32 %v1049, %v990
  %v1051 = vmul.f32 %v1050, %v1049
  %v1052 = vmul.f32 0.5, %v1051
  %v1053 = vsub.f32 1.5, %v1052
  %v1054 = vmul.f32 %v1049, %v1053
  %vm1055 = vweird.f32 %v990
  %vm1056 = vweird.f32 %v1049
  %vm1057 = vmor %vm1055, %vm1056
  %v1058 = vsel %vm1057, %v1049, %v1054
  %v1059 = vrsqrt.pop %v991
  %v1060 = vmul.f32 %v1059, %v991
  %v1061 = vmul.f32 %v1060, %v1059
  %v1062 = vmul.f32 0.5, %v1061
  %v1063 = vsub.f32 1.5, %v1062
  %v1064 = vmul.f32 %v1059, %v1063
  %vm1065 = vweird.f32 %v991
  %vm1066 = vweird.f32 %v1059
  %vm1067 = vmor %vm1065, %vm1066
  %v1068 = vsel %vm1067, %v1059, %v1064
  %v1069 = vrsqrt.pop %v992
  %v1070 = vmul.f32 %v1069, %v992
  %v1071 = vmul.f32 %v1070, %v1069
  %v1072 = vmul.f32 0.5, %v1071
  %v1073 = vsub.f32 1.5, %v1072
  %v1074 = vmul.f32 %v1069, %v1073
  %vm1075 = vweird.f32 %v992
  %vm1076 = vweird.f32 %v1069
  %vm1077 = vmor %vm1075, %vm1076
  %v1078 = vsel %vm1077, %v1069, %v1074
  %v1079 = vrsqrt.pop %v993
  %v1080 = vmul.f32 %v1079, %v993
  %v1081 = vmul.f32 %v1080, %v1079
  %v1082 = vmul.f32 0.5, %v1081
  %v1083 = vsub.f32 1.5, %v1082
  %v1084 = vmul.f32 %v1079, %v1083
  %vm1085 = vweird.f32 %v993
  %vm1086 = vweird.f32 %v1079
  %vm1087 = vmor %vm1085, %vm1086
  %v1088 = vsel %vm1087, %v1079, %v1084
  %v1089 = vrsqrt.pop %v994
  %v1090 = vmul.f32 %v1089, %v994
  %v1091 = vmul.f32 %v1090, %v1089
  %v1092 = vmul.f32 0.5, %v1091
  %v1093 = vsub.f32 1.5, %v1092
  %v1094 = vmul.f32 %v1089, %v1093
  %vm1095 = vweird.f32 %v994
  %vm1096 = vweird.f32 %v1089
  %vm1097 = vmor %vm1095, %vm1096
  %v1098 = vsel %vm1097, %v1089, %v1094
  %v1099 = vrsqrt.pop %v995
  %v1100 = vmul.f32 %v1099, %v995
  %v1101 = vmul.f32 %v1100, %v1099
  %v1102 = vmul.f32 0.5, %v1101
  %v1103 = vsub.f32 1.5, %v1102
  %v1104 = vmul.f32 %v1099, %v1103
  %vm1105 = vweird.f32 %v995
  %vm1106 = vweird.f32 %v1099
  %vm1107 = vmor %vm1105, %vm1106
  %v1108 = vsel %vm1107, %v1099, %v1104
  %v1109 = vrsqrt.pop %v996
  %v1110 = vmul.f32 %v1109, %v996
  %v1111 = vmul.f32 %v1110, %v1109
  %v1112 = vmul.f32 0.5, %v1111
  %v1113 = vsub.f32 1.5, %v1112
  %v1114 = vmul.f32 %v1109, %v1113
  %vm1115 = vweird.f32 %v996
  %vm1116 = vweird.f32 %v1109
  %vm1117 = vmor %vm1115, %vm1116
  %v1118 = vsel %vm1117, %v1109, %v1114
  %v1119 = vrsqrt.pop %v997
  %v1120 = vmul.f32 %v1119, %v997
  %v1121 = vmul.f32 %v1120, %v1119
  %v1122 = vmul.f32 0.5, %v1121
  %v1123 = vsub.f32 1.5, %v1122
  %v1124 = vmul.f32 %v1119, %v1123
  %vm1125 = vweird.f32 %v997
  %vm1126 = vweird.f32 %v1119
  %vm1127 = vmor %vm1125, %vm1126
  %v1128 = vsel %vm1127, %v1119, %v1124
  %v1129 = vrsqrt.pop %v998
  %v1130 = vmul.f32 %v1129, %v998
  %v1131 = vmul.f32 %v1130, %v1129
  %v1132 = vmul.f32 0.5, %v1131
  %v1133 = vsub.f32 1.5, %v1132
  %v1134 = vmul.f32 %v1129, %v1133
  %vm1135 = vweird.f32 %v998
  %vm1136 = vweird.f32 %v1129
  %vm1137 = vmor %vm1135, %vm1136
  %v1138 = vsel %vm1137, %v1129, %v1134
  %v1139 = vmul.f32 %v1008, %v971
  %v1140 = vmul.f32 %v1018, %v972
  %v1141 = vmul.f32 %v1028, %v973
  %v1142 = vmul.f32 %v1038, %v974
  %v1143 = vmul.f32 %v1048, %v975
  %v1144 = vmul.f32 %v1058, %v976
  %v1145 = vmul.f32 %v1068, %v977
  %v1146 = vmul.f32 %v1078, %v978
  %v1147 = vmul.f32 %v1088, %v979
  %v1148 = vmul.f32 %v1098, %v980
  %v1149 = vmul.f32 %v1108, %v981
  %v1150 = vmul.f32 %v1118, %v982
  %v1151 = vmul.f32 %v1128, %v983
  %v1152 = vmul.f32 %v1138, %v984
  %1154 = vset.pattern.permute.xlu0 0
  %1155 = vperm.xlu0 %1154, %v1139
  %v1156 = vpop.permute.xlu0 %1155
  %1159 = vset.pattern.permute.xlu0 0
  %1160 = vperm.xlu0 %1159, %v1140
  %v1161 = vpop.permute.xlu0 %1160
  %1164 = vset.pattern.permute.xlu0 0
  %1165 = vperm.xlu0 %1164, %v1141
  %v1166 = vpop.permute.xlu0 %1165
  %1169 = vset.pattern.permute.xlu0 0
  %1170 = vperm.xlu0 %1169, %v1142
  %v1171 = vpop.permute.xlu0 %1170
  %1174 = vset.pattern.permute.xlu0 0
  %1175 = vperm.xlu0 %1174, %v1143
  %v1176 = vpop.permute.xlu0 %1175
  %1179 = vset.pattern.permute.xlu0 0
  %1180 = vperm.xlu0 %1179, %v1144
  %v1181 = vpop.permute.xlu0 %1180
  %1184 = vset.pattern.permute.xlu0 0
  %1185 = vperm.xlu0 %1184, %v1145
  %v1186 = vpop.permute.xlu0 %1185
  %1189 = vset.pattern.permute.xlu0 0
  %1190 = vperm.xlu0 %1189, %v1146
  %v1191 = vpop.permute.xlu0 %1190
  %1194 = vset.pattern.permute.xlu0 0
  %1195 = vperm.xlu0 %1194, %v1147
  %v1196 = vpop.permute.xlu0 %1195
  %1199 = vset.pattern.permute.xlu0 0
  %1200 = vperm.xlu0 %1199, %v1148
  %v1201 = vpop.permute.xlu0 %1200
  %1204 = vset.pattern.permute.xlu0 0
  %1205 = vperm.xlu0 %1204, %v1149
  %v1206 = vpop.permute.xlu0 %1205
  %1209 = vset.pattern.permute.xlu0 0
  %1210 = vperm.xlu0 %1209, %v1150
  %v1211 = vpop.permute.xlu0 %1210
  %1214 = vset.pattern.permute.xlu0 0
  %1215 = vperm.xlu0 %1214, %v1151
  %v1216 = vpop.permute.xlu0 %1215
  %1219 = vset.pattern.permute.xlu0 0
  %1220 = vperm.xlu0 %1219, %v1152
  %v1221 = vpop.permute.xlu0 %1220
  %v1223 = vmul.f32 %v845, %v1156
  %v1224 = vmul.f32 %v846, %v1156
  %v1225 = vmul.f32 %v847, %v1161
  %v1226 = vmul.f32 %v848, %v1161
  %v1227 = vmul.f32 %v849, %v1166
  %v1228 = vmul.f32 %v850, %v1166
  %v1229 = vmul.f32 %v851, %v1171
  %v1230 = vmul.f32 %v852, %v1171
  %v1231 = vmul.f32 %v853, %v1176
  %v1232 = vmul.f32 %v854, %v1176
  %v1233 = vmul.f32 %v855, %v1181
  %v1234 = vmul.f32 %v856, %v1181
  %v1235 = vmul.f32 %v857, %v1186
  %v1236 = vmul.f32 %v858, %v1186
  %v1237 = vmul.f32 %v859, %v1191
  %v1238 = vmul.f32 %v860, %v1191
  %v1239 = vmul.f32 %v861, %v1196
  %v1240 = vmul.f32 %v862, %v1196
  %v1241 = vmul.f32 %v863, %v1201
  %v1242 = vmul.f32 %v864, %v1201
  %v1243 = vmul.f32 %v865, %v1206
  %v1244 = vmul.f32 %v866, %v1206
  %v1245 = vmul.f32 %v867, %v1211
  %v1246 = vmul.f32 %v868, %v1211
  %v1247 = vmul.f32 %v869, %v1216
  %v1248 = vmul.f32 %v870, %v1216
  %v1249 = vmul.f32 %v871, %v1221
  %v1250 = vmul.f32 %v872, %v1221
  %1252 = vset.pattern.permute.xlu0 1
  %1253 = vperm.xlu0 %1252, %v971
  %v1254 = vpop.permute.xlu0 %1253
  %1257 = vset.pattern.permute.xlu0 1
  %1258 = vperm.xlu0 %1257, %v972
  %v1259 = vpop.permute.xlu0 %1258
  %1262 = vset.pattern.permute.xlu0 1
  %1263 = vperm.xlu0 %1262, %v973
  %v1264 = vpop.permute.xlu0 %1263
  %1267 = vset.pattern.permute.xlu0 1
  %1268 = vperm.xlu0 %1267, %v974
  %v1269 = vpop.permute.xlu0 %1268
  %1272 = vset.pattern.permute.xlu0 1
  %1273 = vperm.xlu0 %1272, %v975
  %v1274 = vpop.permute.xlu0 %1273
  %1277 = vset.pattern.permute.xlu0 1
  %1278 = vperm.xlu0 %1277, %v976
  %v1279 = vpop.permute.xlu0 %1278
  %1282 = vset.pattern.permute.xlu0 1
  %1283 = vperm.xlu0 %1282, %v977
  %v1284 = vpop.permute.xlu0 %1283
  %1287 = vset.pattern.permute.xlu0 1
  %1288 = vperm.xlu0 %1287, %v978
  %v1289 = vpop.permute.xlu0 %1288
  %1292 = vset.pattern.permute.xlu0 1
  %1293 = vperm.xlu0 %1292, %v979
  %v1294 = vpop.permute.xlu0 %1293
  %1297 = vset.pattern.permute.xlu0 1
  %1298 = vperm.xlu0 %1297, %v980
  %v1299 = vpop.permute.xlu0 %1298
  %1302 = vset.pattern.permute.xlu0 1
  %1303 = vperm.xlu0 %1302, %v981
  %v1304 = vpop.permute.xlu0 %1303
  %1307 = vset.pattern.permute.xlu0 1
  %1308 = vperm.xlu0 %1307, %v982
  %v1309 = vpop.permute.xlu0 %1308
  %1312 = vset.pattern.permute.xlu0 1
  %1313 = vperm.xlu0 %1312, %v983
  %v1314 = vpop.permute.xlu0 %1313
  %1317 = vset.pattern.permute.xlu0 1
  %1318 = vperm.xlu0 %1317, %v984
  %v1319 = vpop.permute.xlu0 %1318
  %v1321 = vadd.f32 %v1223, %v1254
  %v1322 = vadd.f32 %v1224, %v1254
  %v1323 = vadd.f32 %v1225, %v1259
  %v1324 = vadd.f32 %v1226, %v1259
  %v1325 = vadd.f32 %v1227, %v1264
  %v1326 = vadd.f32 %v1228, %v1264
  %v1327 = vadd.f32 %v1229, %v1269
  %v1328 = vadd.f32 %v1230, %v1269
  %v1329 = vadd.f32 %v1231, %v1274
  %v1330 = vadd.f32 %v1232, %v1274
  %v1331 = vadd.f32 %v1233, %v1279
  %v1332 = vadd.f32 %v1234, %v1279
  %v1333 = vadd.f32 %v1235, %v1284
  %v1334 = vadd.f32 %v1236, %v1284
  %v1335 = vadd.f32 %v1237, %v1289
  %v1336 = vadd.f32 %v1238, %v1289
  %v1337 = vadd.f32 %v1239, %v1294
  %v1338 = vadd.f32 %v1240, %v1294
  %v1339 = vadd.f32 %v1241, %v1299
  %v1340 = vadd.f32 %v1242, %v1299
  %v1341 = vadd.f32 %v1243, %v1304
  %v1342 = vadd.f32 %v1244, %v1304
  %v1343 = vadd.f32 %v1245, %v1309
  %v1344 = vadd.f32 %v1246, %v1309
  %v1345 = vadd.f32 %v1247, %v1314
  %v1346 = vadd.f32 %v1248, %v1314
  %v1347 = vadd.f32 %v1249, %v1319
  %v1348 = vadd.f32 %v1250, %v1319
  %1349 = vst [vmem:[%s4] sm:$0xff] %v1321
  %1350 = vst.msk [vmem:[%s4 + $0x8] sm:$0xff] %vm774, %v1322
  %1351 = vst [vmem:[%s4 + $0x10] sm:$0xff] %v1323
  %1352 = vst.msk [vmem:[%s4 + $0x18] sm:$0xff] %vm774, %v1324
  %1353 = vst [vmem:[%s4 + $0x20] sm:$0xff] %v1325
  %1354 = vst.msk [vmem:[%s4 + $0x28] sm:$0xff] %vm774, %v1326
  %1355 = vst [vmem:[%s4 + $0x30] sm:$0xff] %v1327
  %1356 = vst.msk [vmem:[%s4 + $0x38] sm:$0xff] %vm774, %v1328
  %1357 = vst [vmem:[%s4 + $0x40] sm:$0xff] %v1329
  %1358 = vst.msk [vmem:[%s4 + $0x48] sm:$0xff] %vm774, %v1330
  %1359 = vst [vmem:[%s4 + $0x50] sm:$0xff] %v1331
  %1360 = vst.msk [vmem:[%s4 + $0x58] sm:$0xff] %vm774, %v1332
  %1361 = vst [vmem:[%s4 + $0x60] sm:$0xff] %v1333
  %1362 = vst.msk [vmem:[%s4 + $0x68] sm:$0xff] %vm774, %v1334
  %1363 = vst [vmem:[%s4 + $0x70] sm:$0xff] %v1335
  %1364 = vst.msk [vmem:[%s4 + $0x78] sm:$0xff] %vm774, %v1336
  %1365 = vst [vmem:[%s4 + $0x80] sm:$0xff] %v1337
  %1366 = vst.msk [vmem:[%s4 + $0x88] sm:$0xff] %vm774, %v1338
  %1367 = vst [vmem:[%s4 + $0x90] sm:$0xff] %v1339
  %1368 = vst.msk [vmem:[%s4 + $0x98] sm:$0xff] %vm774, %v1340
  %1369 = vst [vmem:[%s4 + $0xa0] sm:$0xff] %v1341
  %1370 = vst.msk [vmem:[%s4 + $0xa8] sm:$0xff] %vm774, %v1342
  %1371 = vst [vmem:[%s4 + $0xb0] sm:$0xff] %v1343
  %1372 = vst.msk [vmem:[%s4 + $0xb8] sm:$0xff] %vm774, %v1344
  %1373 = vst [vmem:[%s4 + $0xc0] sm:$0xff] %v1345
  %1374 = vst.msk [vmem:[%s4 + $0xc8] sm:$0xff] %vm774, %v1346
  %1375 = vst [vmem:[%s4 + $0xd0] sm:$0xff] %v1347
  %1376 = vst.msk [vmem:[%s4 + $0xd8] sm:$0xff] %vm774, %v1348
  // Predicated region
  $region18: #{mul_conv1x1_bn.1} parent=0 // pred_check
    _
  $region19: #{mul_conv1x1_bn.1} parent=0 // pred_check_branch
    %1378 = sbr.rel (0) target = $region21
  $region20: #{mul_conv1x1_bn.1} parent=0 // pred_region
    _
  $region21: #{mul_conv1x1_bn.1} parent=0 // pred_fallthru
    _
  // Predicated region
  $region22: #{mul_conv1x1_bn.1} parent=0 // pred_check
    _
  $region23: #{mul_conv1x1_bn.1} parent=0 // pred_check_branch
    %1380 = sbr.rel (0) target = $region25
  $region24: #{mul_conv1x1_bn.1} parent=0 // pred_region
    _
  $region25: #{mul_conv1x1_bn.1} parent=0 // pred_fallthru
    _

</llo_original>
